<compile_context>
chip_gen: v5e
topology: v5e:2x2
jax: 0.10.0
libtpu: 0.0.40
codegen_flags: <defaults>
</compile_context>

<pallas_src>
import functools

import jax
import jax.numpy as jnp
from jax.experimental import pallas as pl
from jax.experimental.pallas import tpu as pltpu


def _gem_kernel(p_ref, x_ref, o_ref, *, eps, row_chunk, pow_dtype):
    # p_ref: SMEM scalar-prefetch ref, shape (1,)
    # x_ref: VMEM tile (tile_n, K, D);  o_ref: VMEM tile (tile_n, D)
    p = p_ref[0]
    inv_p = 1.0 / p                       # one scalar divide, reused everywhere
    tile_n, K, D = x_ref.shape
    inv_k = 1.0 / K                       # compile-time constant (folds the mean)
    n_chunks = tile_n // row_chunk        # static

    # Hoisted once per kernel invocation (not re-emitted per chunk).
    p_pow = p.astype(pow_dtype)
    eps_pow = jnp.asarray(eps, dtype=pow_dtype)

    def process(row_start):
        rows = pl.ds(row_start, row_chunk)
        # Dense (row_chunk, K, D) slab load: no sublane-strided per-k gathers.
        slab = x_ref[rows, :, :].astype(pow_dtype)
        powed = jnp.maximum(slab, eps_pow) ** p_pow          # EUP (log+exp)
        # K-reduction over the sublane dim -> XLU; accumulate in f32.
        pooled = jnp.sum(powed.astype(jnp.float32), axis=1) * inv_k
        o_ref[rows, :] = (pooled ** inv_p).astype(o_ref.dtype)

    if n_chunks == 1:
        process(0)
    else:
        def body(c, carry):
            process(pl.multiple_of(c * row_chunk, row_chunk))
            return carry
        # Unrolled so EUP work from adjacent chunks interleaves in the FIFO.
        jax.lax.fori_loop(0, n_chunks, body, 0, unroll=min(n_chunks, 4))


def _pick_row_chunk(K, D, *, slab_budget_bytes=32 * 1024):
    """Rows per in-kernel chunk: keep the live f32 slab within a few vregs."""
    rc = slab_budget_bytes // max(1, K * D * 4)
    return int(max(8, min(256, (rc // 8) * 8)))


def _pick_tile_n(N, K, D, itemsize, row_chunk, *, vmem_budget_bytes=8 << 20,
                 target_steps=8):
    """Rows per grid step: VMEM-budgeted, but aiming for >= target_steps grid
    steps so block DMAs are hidden behind compute and both v7x cores get work."""
    # Double-buffered input block + double-buffered output block, per row.
    bytes_per_row = 2 * K * D * itemsize + 2 * D * itemsize
    vmem_rows = max(row_chunk, vmem_budget_bytes // bytes_per_row)
    step_rows = pl.cdiv(N, target_steps)
    tile = min(vmem_rows, max(row_chunk, step_rows))
    return int(max(row_chunk, (tile // row_chunk) * row_chunk))


def gem_pallas(x, p_param, eps=1e-6, *, tile_n=None, row_chunk=None,
               bf16_pow=False):
    """x: (N, K, D) float, p_param: (1,) float -> (N, D), same dtype as x.

    bf16_pow=True runs clamp + x**p in bf16 (f32 accumulation / f32 final
    root): ~2x EUP throughput on v6e/v7x at ~1e-2 relative error.  Leave it
    False on v5e (no bf16 EUP) or when exact f32 parity with PyTorch matters.
    """
    N, K, D = x.shape
    if row_chunk is None:
        row_chunk = _pick_row_chunk(K, D)
    if tile_n is None:
        tile_n = _pick_tile_n(N, K, D, x.dtype.itemsize, row_chunk)
    row_chunk = min(row_chunk, tile_n)
    tile_n = max(row_chunk, (tile_n // row_chunk) * row_chunk)

    # No jnp.pad over N: the final partial block is masked by Pallas.
    grid = pl.cdiv(N, tile_n)

    kernel = functools.partial(
        _gem_kernel, eps=eps, row_chunk=row_chunk,
        pow_dtype=jnp.bfloat16 if bf16_pow else jnp.float32)

    # Last two block dims equal the full (K, D) extents, so arbitrary D is
    # legal; D a multiple of 128 keeps the output stores lane-dense.
    grid_spec = pltpu.PrefetchScalarGridSpec(
        num_scalar_prefetch=1,                              # p lands in SMEM
        grid=(grid,),
        in_specs=[pl.BlockSpec((tile_n, K, D), lambda i, p_sref: (i, 0, 0))],
        out_specs=pl.BlockSpec((tile_n, D), lambda i, p_sref: (i, 0)),
    )

    cost = pl.CostEstimate(
        flops=3 * N * K * D + 2 * N * D,                    # clamp + sum + scale
        transcendentals=2 * N * K * D + 2 * N * D,          # log+exp per pow
        bytes_accessed=x.dtype.itemsize * (N * K * D + N * D),
    )

    return pl.pallas_call(
        kernel,
        out_shape=jax.ShapeDtypeStruct((N, D), x.dtype),
        grid_spec=grid_spec,
        compiler_params=pltpu.CompilerParams(
            dimension_semantics=("parallel",),
            vmem_limit_bytes=32 << 20,   # safe on v5e/v6e/v7x; blocks stay <= ~8 MiB
        ),
        cost_estimate=cost,
    )(p_param, x)


def gem_reference(x, p_param, eps=1e-6):
    p = p_param[0]
    return jnp.mean(jnp.maximum(x, eps) ** p, axis=1) ** (1.0 / p)


if __name__ == "__main__":
    key = jax.random.PRNGKey(0)
    k0, k1 = jax.random.split(key)

    # Small shapes consistent with the module: nodes=16, neighbors=8, features=128
    N, K, D = 16, 8, 128
    x = jax.random.normal(k0, (N, K, D), dtype=jnp.float32)

    # Deterministic parameter init, as in __init__: p = ones(1) * 3
    p_param = jnp.ones((1,), dtype=jnp.float32) * 3.0
    eps = 1e-6

    ref = gem_reference(x, p_param, eps)

    # f32-exact path (default; matches the PyTorch reference).
    out = jax.block_until_ready(gem_pallas(x, p_param, eps))
    assert out.shape == (N, D)
    assert jnp.allclose(out, ref, rtol=1e-5, atol=1e-5), "f32 path mismatch"

    # bf16 EUP fast path (v6e/v7x): f32 accumulation + f32 final root.
    out_bf16 = jax.block_until_ready(gem_pallas(x, p_param, eps, bf16_pow=True))
    assert jnp.allclose(out_bf16, ref, rtol=5e-2, atol=5e-2), "bf16 path mismatch"

    # Uneven N: exercises the no-pad tail (Pallas partial final block).
    N2 = 20
    x2 = jax.random.normal(k1, (N2, K, D), dtype=jnp.float32)
    out2 = jax.block_until_ready(gem_pallas(x2, p_param, eps))
    ref2 = gem_reference(x2, p_param, eps)
    assert out2.shape == (N2, D)
    assert jnp.allclose(out2, ref2, rtol=1e-5, atol=1e-5), "uneven-N mismatch"

    print("KERNEL_OK")
</pallas_src>

<mosaic_0001>
module attributes {stable_mosaic.version = 11 : i64} {
  func.func @_gem_kernel(%arg0: i32, %arg1: memref<1xf32, #tpu.memory_space<smem>>, %arg2: memref<8x8x128xf32, #tpu.memory_space<vmem>>, %arg3: memref<8x128xf32, #tpu.memory_space<vmem>>) attributes {dimension_semantics = [#tpu.dimension_semantics<parallel>], iteration_bounds = array<i64: 2>, scalar_prefetch = 1 : i64, scratch_operands = 0 : i64, tpu.core_type = #tpu.core_type<tc>, window_params = [{transform_indices = @transform_0, window_bounds = array<i64: 8, 8, 128>}, {transform_indices = @transform_1, window_bounds = array<i64: 8, 128>}]} {
    %c0 = arith.constant 0 : index
    %0 = memref.load %arg1[%c0] : memref<1xf32, #tpu.memory_space<smem>>
    %cst = arith.constant 1.000000e+00 : f32
    %1 = arith.divf %cst, %0 : f32
    %c0_0 = arith.constant 0 : index
    %c0_1 = arith.constant 0 : index
    %c0_2 = arith.constant 0 : index
    %2 = vector.load %arg2[%c0_0, %c0_1, %c0_2] : memref<8x8x128xf32, #tpu.memory_space<vmem>>, vector<8x8x128xf32>
    %cst_3 = arith.constant 9.99999997E-7 : f32
    %3 = vector.broadcast %cst_3 : f32 to vector<8x8x128xf32>
    %4 = arith.maximumf %2, %3 : vector<8x8x128xf32>
    %5 = vector.broadcast %0 : f32 to vector<8x8x128xf32>
    %6 = math.powf %4, %5 : vector<8x8x128xf32>
    %cst_4 = arith.constant dense<0.000000e+00> : vector<8x128xf32>
    %7 = vector.multi_reduction <add>, %6, %cst_4 [1] : vector<8x8x128xf32> to vector<8x128xf32>
    %cst_5 = arith.constant 1.250000e-01 : f32
    %8 = vector.broadcast %cst_5 : f32 to vector<8x128xf32>
    %9 = arith.mulf %7, %8 : vector<8x128xf32>
    %10 = vector.broadcast %1 : f32 to vector<8x128xf32>
    %11 = math.powf %9, %10 : vector<8x128xf32>
    %c0_6 = arith.constant 0 : index
    %c0_7 = arith.constant 0 : index
    %12 = vector.load %arg3[%c0_6, %c0_7] : memref<8x128xf32, #tpu.memory_space<vmem>>, vector<8x128xf32>
    tpu.vector_store %arg3[%c0_6, %c0_7], %11 {strides = array<i32>} : memref<8x128xf32, #tpu.memory_space<vmem>>, vector<8x128xf32>,
    return
  }
  func.func @transform_0(%arg0: i32, %arg1: memref<1xf32, #tpu.memory_space<smem>>) -> (i32, i32, i32) {
    %c0_i32 = arith.constant 0 : i32
    %c0_i32_0 = arith.constant 0 : i32
    %c0_i32_1 = arith.constant 0 : i32
    return %arg0, %c0_i32, %c0_i32_0 : i32, i32, i32
  }
  func.func @transform_1(%arg0: i32, %arg1: memref<1xf32, #tpu.memory_space<smem>>) -> (i32, i32) {
    %c0_i32 = arith.constant 0 : i32
    %c0_i32_0 = arith.constant 0 : i32
    return %arg0, %c0_i32 : i32, i32
  }
}

</mosaic_0001>

<llo_original>
// kernel: tpu_custom_call.1
$region0: #{tpu_custom_call.1}
  #allocation0 [shape = 'u32[]', space=smem, size = 0x4, offset = 0x4, fixed_abs, tag = 'smem constant byte address 0x4 - core index']
  #allocation1 [shape = 'u32[72,128]{1,0:T(1,128)}', space=vmem, size = 0x9000, scoped, tag = 'internal scratch']
  #allocation2 [shape = 's32[1]{0}', space=sflag, size = 0x4, scoped, tag = 'scoped memory for tpu_custom_call.1']
  #allocation3 [shape = 'f32[1]{0:T(128)S(6)}', space=smem, size = 0x200, scoped, tag = 'prefetched SMEM operand 0']
  %s0 = inlined_call_operand.<no memory space> [shape: f32[1], index: 0, kind: input, shape index: {}]
  %s1 = inlined_call_operand.hbm [shape: f32[16,8,128], index: 1, kind: input, shape index: {}]
  %s2 = inlined_call_operand.hbm [shape: f32[16,128], index: 2, kind: output, shape index: {}]
  %s3 = sld [smem:[#allocation0]]
  $region41: #{tpu_custom_call.1} parent=0
    _
  %s5 = ssub.s32 1, %s3
  %s6 = scalar_select 0, %s5, %s3
  %7 = sst [smem:[#allocation3]] %s0
  $region1: #{tpu_custom_call.1} parent=0
    #allocation4 [shape = 'u8[65536]{0}', space=vmem, size = 0x10000, scoped, tag = 'input window, operand 1']
    #allocation5 [shape = 's32[2]{0}', space=sflag, size = 0x8, scoped, tag = 'scoped memory for tpu_custom_call.1']
    #allocation6 [shape = 's32[2]{0}', space=sflag, size = 0x8, scoped, tag = 'scoped memory for tpu_custom_call.1']
    #allocation7 [shape = 'u8[8192]{0}', space=vmem, size = 0x2000, scoped, tag = 'output window, operand 0']
    %8 = vsyncpa [#allocation5], 0
    %s9 = scalar_lea.sflag [#allocation5], 1
    %10 = vsyncpa %s9, 0
    %11 = vsyncpa [#allocation6], 0
    %s12 = scalar_lea.sflag [#allocation6], 1
    %13 = vsyncpa %s12, 0
    loop: start=0, step=1, limit=4
    $region2: #{tpu_custom_call.1} parent=1 // loop_pre_header
      _
    $region3: #{tpu_custom_call.1} parent=1 // loop_header
      %s15 = sphi 0, %s19
      %p16 = scmp.ge.s32.totalorder %s15, 4
      %s25 = sphi 0, %s27
      %s28 = sphi 0, %s25
      %s29 = sphi 0, %s28
      %s45 = sphi 0, %s29
      %s51 = sphi 0, %s53
      %s54 = sphi 0, %s51
      %s55 = sphi 0, %s54
      %s71 = sphi 0, %s55
    $region4: #{tpu_custom_call.1} parent=1 // loop_header_branch
      %18 = sbr.rel (%p16) target = $region8
    $region5: #{tpu_custom_call.1} parent=1 // loop_body
      %s20 = ssub.s32 %s15, 1
      %s21 = ssub.s32 %s15, 2
      %s22 = sadd.s32 %s15, 1
      %s23 = ssub.s32 %s15, %s22
      %p24 = scmp.eq.s32.totalorder %s23, 0
      %s26 = sadd.s32 %s25, 1
      %s27 = scalar_select %p24, %s25, %s26
      %p30 = pneg %p24
      %p31 = scmp.eq.s32.totalorder %s15, 1
      %p32 = por %p30, %p31
      %p33 = scmp.ne.s32.totalorder %s25, %s28
      %p34 = scmp.eq.s32.totalorder %s15, 0
      %p35 = por %p33, %p34
      %p36 = scmp.ne.s32.totalorder %s25, %s28
      %p37 = scmp.eq.s32.totalorder %s20, 1
      %p38 = por %p36, %p37
      %p39 = scmp.ne.s32.totalorder %s28, %s29
      %p40 = scmp.eq.s32.totalorder %s20, 0
      %p41 = por %p39, %p40
      %p42 = scmp.ne.s32.totalorder %s28, %s29
      %p43 = scmp.eq.s32.totalorder %s21, 1
      %p44 = por %p42, %p43
      %p46 = scmp.ne.s32.totalorder %s29, %s45
      %p47 = scmp.eq.s32.totalorder %s21, 0
      %p48 = por %p46, %p47
      %s49 = ssub.s32 %s15, %s22
      %p50 = scmp.eq.s32.totalorder %s49, 0
      %s52 = sadd.s32 %s51, 1
      %s53 = scalar_select %p50, %s51, %s52
      %p56 = pneg %p50
      %p57 = scmp.eq.s32.totalorder %s15, 1
      %p58 = por %p56, %p57
      %p59 = scmp.ne.s32.totalorder %s51, %s54
      %p60 = scmp.eq.s32.totalorder %s15, 0
      %p61 = por %p59, %p60
      %p62 = scmp.ne.s32.totalorder %s51, %s54
      %p63 = scmp.eq.s32.totalorder %s20, 1
      %p64 = por %p62, %p63
      %p65 = scmp.ne.s32.totalorder %s54, %s55
      %p66 = scmp.eq.s32.totalorder %s20, 0
      %p67 = por %p65, %p66
      %p68 = scmp.ne.s32.totalorder %s54, %s55
      %p69 = scmp.eq.s32.totalorder %s21, 1
      %p70 = por %p68, %p69
      %p72 = scmp.ne.s32.totalorder %s55, %s71
      %p73 = scmp.eq.s32.totalorder %s21, 0
      %p74 = por %p72, %p73
      %p75 = scmp.le.s32.totalorder 1, %s15
      %p76 = scmp.lt.s32.totalorder %s15, 3
      %p77 = pnand %p75, %p76
      %p78 = pneg %p77
      // Predicated region
      $region9: #{tpu_custom_call.1} parent=5 // pred_check
        _
      $region10: #{tpu_custom_call.1} parent=5 // pred_check_branch
        %80 = sbr.rel (%p77) target = $region12
      $region11: #{tpu_custom_call.1} parent=5 // pred_region
        %s81 = ssub.s32 %s15, 1
      $region12: #{tpu_custom_call.1} parent=5 // pred_fallthru
        _
      %p82 = scmp.lt.s32.totalorder %s15, 2
      // Predicated region
      $region13: #{tpu_custom_call.1} parent=5 // pred_check
        %p83 = pneg %p82
      $region14: #{tpu_custom_call.1} parent=5 // pred_check_branch
        %85 = sbr.rel (%p83) target = $region16
      $region15: #{tpu_custom_call.1} parent=5 // pred_region
        // Predicated region
        $region17: #{tpu_custom_call.1} parent=15 // pred_check
          %p86 = pneg %p35
        $region18: #{tpu_custom_call.1} parent=15 // pred_check_branch
          %88 = sbr.rel (%p86) target = $region20
        $region19: #{tpu_custom_call.1} parent=15 // pred_region
          %s89 = sand.u32 %s25, 1
          %s90 = scalar_lea.sflag [#allocation5], %s89
          %s91 = sand.u32 %s25, 1
          %s92 = smul.addr %s91, 64
          %s93 = scalar_lea.vmem [#allocation4], %s92
          %s94 = smul.u32 8, %s15
          %96 = vsyncadd %s90, 0
          %s97 = smul.addr %s94, 8
          %s98 = scalar_lea.hbm %s1, %s97
          %s99 = sshll.u32 %s98, 4
          %s100 = int_to_ptr.hbm [resolvable:$true] %s99
          %s101 = sshll.u32 %s93, 4
          %s102 = int_to_ptr.vmem [resolvable:$true] %s101
          %107 = dma.hbm_to_vmem [thread:$0]  %s100, 1024, %s102, %s90, 128, 128, 8
        $region20: #{tpu_custom_call.1} parent=15 // pred_fallthru
          _
      $region16: #{tpu_custom_call.1} parent=5 // pred_fallthru
        _
      %p108 = scmp.le.s32.totalorder 1, %s15
      %p109 = scmp.lt.s32.totalorder %s15, 3
      %p110 = pnand %p108, %p109
      %p111 = pneg %p110
      // Predicated region
      $region21: #{tpu_custom_call.1} parent=5 // pred_check
        _
      $region22: #{tpu_custom_call.1} parent=5 // pred_check_branch
        %113 = sbr.rel (%p110) target = $region24
      $region23: #{tpu_custom_call.1} parent=5 // pred_region
        %s114 = ssub.s32 %s15, 1
        %s115 = sand.u32 %s28, 1
        %s116 = scalar_lea.sflag [#allocation5], %s115
        %s117 = sand.u32 %s28, 1
        %s118 = smul.addr %s117, 64
        %s119 = scalar_lea.vmem [#allocation4], %s118
        // Predicated region
        $region25: #{tpu_custom_call.1} parent=23 // pred_check
          %p120 = pneg %p41
        $region26: #{tpu_custom_call.1} parent=23 // pred_check_branch
          %122 = sbr.rel (%p120) target = $region28
        $region27: #{tpu_custom_call.1} parent=23 // pred_region
          %124 = dma.done %s116, 1024
        $region28: #{tpu_custom_call.1} parent=23 // pred_fallthru
          _
        %s125 = sand.u32 %s28, 1
        %s126 = scalar_lea.sflag [#allocation5], %s125
        %s127 = sand.u32 %s28, 1
        %s128 = smul.addr %s127, 64
        %s129 = scalar_lea.vmem [#allocation4], %s128
        %p130 = pneg %p41
        %p131 = pneg %p38
        %p132 = pneg %p67
        %p133 = pneg %p64
        %s134 = sand.u32 %s54, 1
        %s135 = scalar_lea.sflag [#allocation6], %s134
        %s136 = sand.u32 %s54, 1
        %s137 = smul.addr %s136, 8
        %s138 = scalar_lea.vmem [#allocation7], %s137
        %s139 = smul.u32 8, %s20
        %s140 = sld [smem:[#allocation3]]
        %v141 = vstv %s140
        %v142 = vrcp.pop %v141
        %v143 = vmul.f32 %v141, %v142
        %v144 = vsub.f32 1.0, %v143
        %v145 = vmul.f32 %v142, %v144
        %v146 = vadd.f32 %v142, %v145
        %vm147 = vweird.f32 %v141
        %vm148 = vweird.f32 %v142
        %vm149 = vmor %vm147, %vm148
        %v150 = vsel %vm149, %v142, %v146
        %v151 = vand.u32 2147483647, %v141
        %vm152 = vcmp.eq.f32.partialorder %v151, 8.507059e+37
        %v153 = vand.u32 %v141, 2147483648
        %v154 = vor.u32 1.1754944e-38, %v153
        %v155 = vsel %vm152, %v154, %v150
        %s156 = vtos %v155
        %v157 = vld [vmem:[%s119] sm:$0xff]
        %v158 = vld [vmem:[%s119 + $0x8] sm:$0xff]
        %v159 = vld [vmem:[%s119 + $0x10] sm:$0xff]
        %v160 = vld [vmem:[%s119 + $0x18] sm:$0xff]
        %v161 = vld [vmem:[%s119 + $0x20] sm:$0xff]
        %v162 = vld [vmem:[%s119 + $0x28] sm:$0xff]
        %v163 = vld [vmem:[%s119 + $0x30] sm:$0xff]
        %v164 = vld [vmem:[%s119 + $0x38] sm:$0xff]
        %v165 = vmax.f32 %v157, 1e-06
        %v166 = vmax.f32 %v158, 1e-06
        %v167 = vmax.f32 %v159, 1e-06
        %v168 = vmax.f32 %v160, 1e-06
        %v169 = vmax.f32 %v161, 1e-06
        %v170 = vmax.f32 %v162, 1e-06
        %v171 = vmax.f32 %v163, 1e-06
        %v172 = vmax.f32 %v164, 1e-06
        %v173 = vstv %s140
        %v174 = vpow.f32 %v165, %v173
        %v175 = vpow.f32 %v166, %v173
        %v176 = vpow.f32 %v167, %v173
        %v177 = vpow.f32 %v168, %v173
        %v178 = vpow.f32 %v169, %v173
        %v179 = vpow.f32 %v170, %v173
        %v180 = vpow.f32 %v171, %v173
        %v181 = vpow.f32 %v172, %v173
        %v182 = vrot.slane %v174, 4
        %v183 = vadd.f32 %v174, %v182
        %v184 = vrot.slane %v183, 2
        %v185 = vadd.f32 %v183, %v184
        %v186 = vrot.slane %v185, 1
        %v187 = vadd.f32 %v185, %v186
        %v188 = vrot.slane %v175, 4
        %v189 = vadd.f32 %v175, %v188
        %v190 = vrot.slane %v189, 2
        %v191 = vadd.f32 %v189, %v190
        %v192 = vrot.slane %v191, 1
        %v193 = vadd.f32 %v191, %v192
        %v194 = vrot.slane %v176, 4
        %v195 = vadd.f32 %v176, %v194
        %v196 = vrot.slane %v195, 2
        %v197 = vadd.f32 %v195, %v196
        %v198 = vrot.slane %v197, 1
        %v199 = vadd.f32 %v197, %v198
        %v200 = vrot.slane %v177, 4
        %v201 = vadd.f32 %v177, %v200
        %v202 = vrot.slane %v201, 2
        %v203 = vadd.f32 %v201, %v202
        %v204 = vrot.slane %v203, 1
        %v205 = vadd.f32 %v203, %v204
        %v206 = vrot.slane %v178, 4
        %v207 = vadd.f32 %v178, %v206
        %v208 = vrot.slane %v207, 2
        %v209 = vadd.f32 %v207, %v208
        %v210 = vrot.slane %v209, 1
        %v211 = vadd.f32 %v209, %v210
        %v212 = vrot.slane %v179, 4
        %v213 = vadd.f32 %v179, %v212
        %v214 = vrot.slane %v213, 2
        %v215 = vadd.f32 %v213, %v214
        %v216 = vrot.slane %v215, 1
        %v217 = vadd.f32 %v215, %v216
        %v218 = vrot.slane %v180, 4
        %v219 = vadd.f32 %v180, %v218
        %v220 = vrot.slane %v219, 2
        %v221 = vadd.f32 %v219, %v220
        %v222 = vrot.slane %v221, 1
        %v223 = vadd.f32 %v221, %v222
        %v224 = vrot.slane %v181, 4
        %v225 = vadd.f32 %v181, %v224
        %v226 = vrot.slane %v225, 2
        %v227 = vadd.f32 %v225, %v226
        %v228 = vrot.slane %v227, 1
        %v229 = vadd.f32 %v227, %v228
        %v230 = vmul.f32 %v187, 0.125
        %v231 = vmul.f32 %v193, 0.125
        %v232 = vmul.f32 %v199, 0.125
        %v233 = vmul.f32 %v205, 0.125
        %v234 = vmul.f32 %v211, 0.125
        %v235 = vmul.f32 %v217, 0.125
        %v236 = vmul.f32 %v223, 0.125
        %v237 = vmul.f32 %v229, 0.125
        %v238 = vstv %s156
        %v239 = vpow.f32 %v230, %v238
        %v240 = vpow.f32 %v231, %v238
        %v241 = vpow.f32 %v232, %v238
        %v242 = vpow.f32 %v233, %v238
        %v243 = vpow.f32 %v234, %v238
        %v244 = vpow.f32 %v235, %v238
        %v245 = vpow.f32 %v236, %v238
        %v246 = vpow.f32 %v237, %v238
        %vm255 = vcmask 1041409
        %v256 = vsel %vm255, %v240, %v239
        %vm257 = vcmask 1042434
        %v258 = vsel %vm257, %v241, %v256
        %vm259 = vcmask 1043459
        %v260 = vsel %vm259, %v242, %v258
        %vm261 = vcmask 1044484
        %v262 = vsel %vm261, %v243, %v260
        %vm263 = vcmask 1045509
        %v264 = vsel %vm263, %v244, %v262
        %vm265 = vcmask 1046534
        %v266 = vsel %vm265, %v245, %v264
        %vm267 = vcmask 1047559
        %v268 = vsel %vm267, %v246, %v266
        %270 = vst [vmem:[%s138] sm:$0xff] %v268
        %s271 = sand.u32 %s54, 1
        %s272 = scalar_lea.sflag [#allocation6], %s271
        %s273 = sand.u32 %s54, 1
        %s274 = smul.addr %s273, 8
        %s275 = scalar_lea.vmem [#allocation7], %s274
        // Predicated region
        $region29: #{tpu_custom_call.1} parent=23 // pred_check
          %p276 = pneg %p64
        $region30: #{tpu_custom_call.1} parent=23 // pred_check_branch
          %278 = sbr.rel (%p276) target = $region32
        $region31: #{tpu_custom_call.1} parent=23 // pred_region
          %280 = vsyncadd %s272, 0
          %s281 = smul.addr %s20, 8
          %s282 = scalar_lea.hbm %s2, %s281
          %s284 = sshll.u32 %s275, 4
          %s285 = int_to_ptr.vmem [resolvable:$true] %s284
          %s286 = sshll.u32 %s282, 4
          %s287 = int_to_ptr.hbm [resolvable:$true] %s286
          %289 = dma.vmem_to_hbm [thread:$0]  %s285, 128, %s287, %s272
        $region32: #{tpu_custom_call.1} parent=23 // pred_fallthru
          _
      $region24: #{tpu_custom_call.1} parent=5 // pred_fallthru
        _
      %p290 = scmp.le.s32.totalorder 2, %s15
      // Predicated region
      $region33: #{tpu_custom_call.1} parent=5 // pred_check
        %p291 = pneg %p290
      $region34: #{tpu_custom_call.1} parent=5 // pred_check_branch
        %293 = sbr.rel (%p291) target = $region36
      $region35: #{tpu_custom_call.1} parent=5 // pred_region
        %s294 = ssub.s32 %s15, 2
        // Predicated region
        $region37: #{tpu_custom_call.1} parent=35 // pred_check
          %p295 = pneg %p70
        $region38: #{tpu_custom_call.1} parent=35 // pred_check_branch
          %297 = sbr.rel (%p295) target = $region40
        $region39: #{tpu_custom_call.1} parent=35 // pred_region
          %s298 = sand.u32 %s55, 1
          %s299 = scalar_lea.sflag [#allocation6], %s298
          %s300 = sand.u32 %s55, 1
          %s301 = smul.addr %s300, 8
          %s302 = scalar_lea.vmem [#allocation7], %s301
          %304 = dma.done %s299, 128
        $region40: #{tpu_custom_call.1} parent=35 // pred_fallthru
          _
      $region36: #{tpu_custom_call.1} parent=5 // pred_fallthru
        _
    $region6: #{tpu_custom_call.1} parent=1 // loop_footer
      %s19 = sadd.s32 1, %s15
    $region7: #{tpu_custom_call.1} parent=1 // loop_footer_branch
      %14 = sbr.rel target = $region3
    $region8: #{tpu_custom_call.1} parent=1 // loop_exit
      _
    %305 = vsyncpa [#allocation5], 1
    %s306 = scalar_lea.sflag [#allocation5], 1
    %307 = vsyncpa %s306, 1
    %308 = vsyncpa [#allocation6], 1
    %s309 = scalar_lea.sflag [#allocation6], 1
    %310 = vsyncpa %s309, 1

</llo_original>
